<compile_context>
chip_gen: v7x
topology: tpu7x:2x2x1
jax: 0.10.0
libtpu: 0.0.40
codegen_flags: <defaults>
</compile_context>

<pallas_src>
import jax
import jax.numpy as jnp
from jax.experimental import pallas as pl
from jax.experimental.pallas import tpu as pltpu

DIM_HIDDEN = 32            # cfg.gt.dim_hidden == cfg.gnn.dim_inner
CATELIST = (11, 31)        # default branch of GPSModel
EPS_BN = 1e-5


# --------------------------------------------------------------------------
# Kernel 1: fused node+edge encoder (Linear with BN pre-folded).
# One pallas_call for both encoders: the scalar-prefetched `sel` array picks
# which stacked weight / bias a given row tile uses.
# --------------------------------------------------------------------------
def _encoder_kernel(sel_ref, x_ref, w_ref, b_ref, o_ref):
    del sel_ref  # consumed by the index_maps only
    y = jnp.dot(x_ref[...], w_ref[0], preferred_element_type=jnp.float32)
    o_ref[...] = (y + b_ref[0]).astype(o_ref.dtype)


def _fold_bn(w, b, gamma, beta, mean, var):
    """(w_eff, b_eff) such that x @ w_eff + b_eff == BN_eval(x @ w + b)."""
    scale = gamma * jax.lax.rsqrt(var + EPS_BN)          # [1, D]
    return w * scale, (b - mean) * scale + beta


def encode_nodes_and_edges(x, edge_attr, params, *, tile=256):
    """Apply node encoder (Linear+BN) to x and edge encoder (Linear+BN) to
    edge_attr with a single Pallas kernel launch."""
    D = params["node_w"].shape[1]
    wn, bn = _fold_bn(params["node_w"], params["node_b"],
                      params["node_bn_gamma"], params["node_bn_beta"],
                      params["node_bn_mean"], params["node_bn_var"])
    we, be = _fold_bn(params["edge_w"], params["edge_b"],
                      params["edge_bn_gamma"], params["edge_bn_beta"],
                      params["edge_bn_mean"], params["edge_bn_var"])
    Kn, Ke = wn.shape[0], we.shape[0]
    Kmax = max(Kn, Ke)
    w_stack = jnp.stack([jnp.pad(wn, ((0, Kmax - Kn), (0, 0))),
                         jnp.pad(we, ((0, Kmax - Ke), (0, 0)))])          # [2, Kmax, D]
    b_stack = jnp.stack([bn, be])                                         # [2, 1, D]

    Mn, Me = x.shape[0], edge_attr.shape[0]
    n_tiles_n = -(-Mn // tile)
    n_tiles_e = -(-Me // tile)
    xp = jnp.pad(x, ((0, n_tiles_n * tile - Mn), (0, Kmax - Kn)))
    ep = jnp.pad(edge_attr, ((0, n_tiles_e * tile - Me), (0, Kmax - Ke)))
    rows = jnp.concatenate([xp, ep], axis=0)                              # [T*tile, Kmax]
    sel = jnp.concatenate([jnp.zeros((n_tiles_n,), jnp.int32),
                           jnp.ones((n_tiles_e,), jnp.int32)])
    n_tiles = n_tiles_n + n_tiles_e

    out = pl.pallas_call(
        _encoder_kernel,
        out_shape=jax.ShapeDtypeStruct((n_tiles * tile, D), jnp.float32),
        grid_spec=pltpu.PrefetchScalarGridSpec(
            num_scalar_prefetch=1,
            grid=(n_tiles,),
            in_specs=[
                pl.BlockSpec((tile, Kmax), lambda i, s: (i, 0)),
                pl.BlockSpec((1, Kmax, D), lambda i, s: (s[i], 0, 0)),
                pl.BlockSpec((1, 1, D), lambda i, s: (s[i], 0, 0)),
            ],
            out_specs=pl.BlockSpec((tile, D), lambda i, s: (i, 0)),
        ),
        compiler_params=pltpu.CompilerParams(dimension_semantics=("parallel",)),
    )(sel, rows, w_stack, b_stack)

    x_out = out[:Mn]
    e_out = out[n_tiles_n * tile:n_tiles_n * tile + Me]
    return x_out, e_out


# --------------------------------------------------------------------------
# Kernel 2: CateFeatureEmbedding hot path — one bf16 MXU matmul per tile.
#   multi-hot over (packed-row offset + global embedding id) @ block-diagonal
#   folded table  ->  [tile//P, P*D] lane-dense output.
# --------------------------------------------------------------------------
def _cate_embed_kernel(idx_ref, tab_ref, b_ref, o_ref):
    idx = idx_ref[...]                                     # [rows, P*C] int32
    rows = idx.shape[0]
    K = tab_ref.shape[0]                                   # P * num_emb
    iota = jax.lax.broadcasted_iota(jnp.int32, (rows, K), 1)
    multihot = jnp.zeros((rows, K), jnp.bfloat16)
    for j in range(idx.shape[1]):                          # P*C static compares
        multihot += (iota == idx[:, j:j + 1]).astype(jnp.bfloat16)
    out = jnp.dot(multihot, tab_ref[...], preferred_element_type=jnp.float32)
    o_ref[...] = (out + b_ref[...]).astype(o_ref.dtype)


def cate_feature_embedding(dist_cat, emb_table, lin_w, lin_b, catelist, *, tile=512):
    """dist_cat: [B, N, N, C] int32 -> [B, N, N, D] float32.
    NOTE: like the host-side asserts in __main__, indices are assumed in-range
    per category (PyTorch nn.Embedding would raise); no in-kernel masking."""
    B, N1, N2, C = dist_cat.shape
    num_emb, D = emb_table.shape
    assert num_emb == sum(catelist) and C == len(catelist)

    starts = [0]
    for v in catelist[:-1]:
        starts.append(starts[-1] + v)
    starts_arr = jnp.array(starts, jnp.int32).reshape(1, C)

    # Fold Linear(C*D -> D) into the table: folded[starts[c]+k] = emb[...] @ W_c
    folded = jnp.concatenate(
        [emb_table[starts[c]:starts[c] + catelist[c]] @ lin_w[c * D:(c + 1) * D]
         for c in range(C)], axis=0)                                  # [num_emb, D]

    # Pack P logical rows per physical row -> 128-lane-dense output stores.
    P = 128 // D if 128 % D == 0 else 1
    tab = jnp.zeros((P * num_emb, P * D), jnp.float32)
    for j in range(P):
        tab = tab.at[j * num_emb:(j + 1) * num_emb, j * D:(j + 1) * D].set(folded)
    tab = tab.astype(jnp.bfloat16)                  # bf16 MXU operand; one-hot exact
    bias = jnp.tile(lin_b.reshape(1, D), (1, P))    # [1, P*D]

    M = B * N1 * N2
    assert tile % (8 * P) == 0
    idx = dist_cat.reshape(M, C).astype(jnp.int32) + starts_arr       # global emb ids
    pad = (-M) % tile
    idx = jnp.pad(idx, ((0, pad), (0, 0)))          # padded rows discarded below
    Mp = M + pad
    idx = (idx.reshape(Mp // P, P, C)
           + (jnp.arange(P, dtype=jnp.int32) * num_emb)[None, :, None]
           ).reshape(Mp // P, P * C)

    # (On v7x keep Mp//tile >= 2 so both TensorCores get work for large inputs.)
    out = pl.pallas_call(
        _cate_embed_kernel,
        out_shape=jax.ShapeDtypeStruct((Mp // P, P * D), jnp.float32),
        grid_spec=pltpu.PrefetchScalarGridSpec(
            num_scalar_prefetch=0,
            grid=(Mp // tile,),
            in_specs=[
                pl.BlockSpec((tile // P, P * C), lambda i: (i, 0)),
                pl.BlockSpec((P * num_emb, P * D), lambda i: (0, 0)),
                pl.BlockSpec((1, P * D), lambda i: (0, 0)),
            ],
            out_specs=pl.BlockSpec((tile // P, P * D), lambda i: (i, 0)),
        ),
        compiler_params=pltpu.CompilerParams(dimension_semantics=("parallel",)),
    )(idx, tab, bias)

    return out.reshape(Mp, D)[:M].reshape(B, N1, N2, D)


# --------------------------------------------------------------------------
# Glue: dense structural features.  complete_edge_index enumerates all (i, j)
# pairs of each graph in row-major order, so the dense adjacency is a per-graph
# reshape + static-slice update (no serialized XLA scatter).
# --------------------------------------------------------------------------
def complete_to_dense(edge_attr, node_counts, max_nodes):
    B = len(node_counts)
    dense = jnp.zeros((B, max_nodes, max_nodes), edge_attr.dtype)
    off = 0
    for g, n in enumerate(node_counts):
        chunk = edge_attr[off:off + n * n].reshape(n, n)
        dense = dense.at[g, :n, :n].set(chunk)
        off += n * n
    return dense


# --------------------------------------------------------------------------
# GPSModel forward (encoder -> dist embedding; layers / post_mp are TODO)
# --------------------------------------------------------------------------
def gps_model_forward(params, batch, node_counts, max_nodes):
    x, edge_attr = encode_nodes_and_edges(batch["x"], batch["edge_attr"], params)

    dist = complete_to_dense(batch["complete_edge_dist"], node_counts, max_nodes)
    spd = complete_to_dense(batch["complete_edge_SPD"], node_counts, max_nodes)
    if len(CATELIST) == 1:
        dist_cat = jnp.stack([spd], axis=3)
    else:
        dist_cat = jnp.stack([dist, spd], axis=3)                     # [B, N, N, 2]

    dist_emb = cate_feature_embedding(
        dist_cat, params["cate_emb"], params["cate_lin_w"], params["cate_lin_b"], CATELIST)

    # TODO(synk): GPSLayer stack (self.layers) and GNNHead (self.post_mp) are
    # cfg-registered modules not provided; forward stops after dist embedding.
    return {"x": x, "edge_attr": edge_attr, "dist": dist_emb}


def init_params(key, dim_in, dim_edge_in, dim_h):
    ks = jax.random.split(key, 4)
    num_emb = sum(CATELIST)
    n_cate = len(CATELIST)
    lin_in = dim_h if n_cate == 1 else 2 * dim_h
    ones = lambda n: jnp.ones((1, n), jnp.float32)
    zeros = lambda n: jnp.zeros((1, n), jnp.float32)
    return {
        "node_w": 0.1 * jax.random.normal(ks[0], (dim_in, dim_h), jnp.float32),
        "node_b": zeros(dim_h),
        "node_bn_gamma": ones(dim_h), "node_bn_beta": zeros(dim_h),
        "node_bn_mean": zeros(dim_h), "node_bn_var": ones(dim_h),
        "edge_w": 0.1 * jax.random.normal(ks[1], (dim_edge_in, dim_h), jnp.float32),
        "edge_b": zeros(dim_h),
        "edge_bn_gamma": ones(dim_h), "edge_bn_beta": zeros(dim_h),
        "edge_bn_mean": zeros(dim_h), "edge_bn_var": ones(dim_h),
        "cate_emb": 0.1 * jax.random.normal(ks[2], (num_emb, dim_h), jnp.float32),
        "cate_lin_w": 0.1 * jax.random.normal(ks[3], (lin_in, dim_h), jnp.float32),
        "cate_lin_b": zeros(dim_h),
    }


if __name__ == "__main__":
    key = jax.random.PRNGKey(0)
    kx, ke, kd, ks, kp = jax.random.split(key, 5)

    dim_in, dim_edge_in, dim_h = 16, 8, DIM_HIDDEN
    node_counts = (12, 16)
    num_graphs, max_nodes = len(node_counts), max(node_counts)
    num_nodes = sum(node_counts)

    # node / edge features
    x = jax.random.normal(kx, (num_nodes, dim_in), jnp.float32)
    num_edges = 40
    edge_attr = jax.random.normal(ke, (num_edges, dim_edge_in), jnp.float32)

    # complete (all-pairs, per-graph, row-major order) structural edge attributes
    n_complete = sum(n * n for n in node_counts)
    complete_edge_dist = jax.random.randint(kd, (n_complete,), 0, CATELIST[0]).astype(jnp.int32)
    complete_edge_SPD = jax.random.randint(ks, (n_complete,), 0, CATELIST[1]).astype(jnp.int32)

    # (PyTorch raises if indices out of range — validated host-side here)
    assert bool((complete_edge_dist >= 0).all()) and bool((complete_edge_dist < CATELIST[0]).all())
    assert bool((complete_edge_SPD >= 0).all()) and bool((complete_edge_SPD < CATELIST[1]).all())

    batch = {
        "x": x,
        "edge_attr": edge_attr,
        "complete_edge_dist": complete_edge_dist,
        "complete_edge_SPD": complete_edge_SPD,
    }
    params = init_params(kp, dim_in, dim_edge_in, dim_h)

    out = gps_model_forward(params, batch, node_counts, max_nodes)
    jax.block_until_ready(out)

    assert out["x"].shape == (num_nodes, dim_h)
    assert out["edge_attr"].shape == (num_edges, dim_h)
    assert out["dist"].shape == (num_graphs, max_nodes, max_nodes, dim_h)

    # ---- lightweight plain-JAX reference check -------------------------------
    def bn_lin_ref(v, w, b, g, be, m, var):
        return ((v @ w + b) - m) * (g * jax.lax.rsqrt(var + EPS_BN)) + be

    x_exp = bn_lin_ref(x, params["node_w"], params["node_b"], params["node_bn_gamma"],
                       params["node_bn_beta"], params["node_bn_mean"], params["node_bn_var"])
    e_exp = bn_lin_ref(edge_attr, params["edge_w"], params["edge_b"], params["edge_bn_gamma"],
                       params["edge_bn_beta"], params["edge_bn_mean"], params["edge_bn_var"])
    dist_d = complete_to_dense(complete_edge_dist, node_counts, max_nodes)
    spd_d = complete_to_dense(complete_edge_SPD, node_counts, max_nodes)
    dc = jnp.stack([dist_d, spd_d], axis=3)
    emb = params["cate_emb"][dc + jnp.array([0, CATELIST[0]], jnp.int32)]   # [B,N,N,2,D]
    cat = emb.reshape(dc.shape[0], dc.shape[1], dc.shape[2], -1)
    dist_exp = cat @ params["cate_lin_w"] + params["cate_lin_b"].reshape(-1)

    assert bool(jnp.allclose(out["x"], x_exp, atol=1e-2, rtol=1e-2))
    assert bool(jnp.allclose(out["edge_attr"], e_exp, atol=1e-2, rtol=1e-2))
    assert bool(jnp.allclose(out["dist"], dist_exp, atol=5e-2, rtol=5e-2))

    print("KERNEL_OK")
</pallas_src>

<mosaic_0001>
module attributes {stable_mosaic.version = 11 : i64} {
  func.func @_encoder_kernel(%arg0: i32, %arg1: memref<2xi32, #tpu.memory_space<smem>>, %arg2: memref<256x16xf32, #tpu.memory_space<vmem>>, %arg3: memref<1x16x32xf32, #tpu.memory_space<vmem>>, %arg4: memref<1x1x32xf32, #tpu.memory_space<vmem>>, %arg5: memref<256x32xf32, #tpu.memory_space<vmem>>) attributes {dimension_semantics = [#tpu.dimension_semantics<parallel>], iteration_bounds = array<i64: 2>, scalar_prefetch = 1 : i64, scratch_operands = 0 : i64, tpu.core_type = #tpu.core_type<tc>, window_params = [{transform_indices = @transform_0, window_bounds = array<i64: 256, 16>}, {transform_indices = @transform_1, window_bounds = array<i64: 1, 16, 32>}, {transform_indices = @transform_2, window_bounds = array<i64: 1, 1, 32>}, {transform_indices = @transform_3, window_bounds = array<i64: 256, 32>}]} {
    %c0 = arith.constant 0 : index
    %c0_0 = arith.constant 0 : index
    %0 = vector.load %arg2[%c0, %c0_0] : memref<256x16xf32, #tpu.memory_space<vmem>>, vector<256x16xf32>
    %c0_1 = arith.constant 0 : index
    %c0_2 = arith.constant 0 : index
    %c0_3 = arith.constant 0 : index
    %1 = vector.load %arg3[%c0_1, %c0_2, %c0_3] : memref<1x16x32xf32, #tpu.memory_space<vmem>>, vector<1x16x32xf32>
    %2 = vector.shape_cast %1 : vector<1x16x32xf32> to vector<16x32xf32>
    %cst = arith.constant dense<0.000000e+00> : vector<256x32xf32>
    %3 = tpu.matmul %0, %2, %cst {dimension_numbers = #tpu.dot_dimension_numbers<[1], [0], [0], [1], [0, 0, 1, 1], [], []>} : vector<256x16xf32>, vector<16x32xf32>, vector<256x32xf32> -> vector<256x32xf32>
    %c0_4 = arith.constant 0 : index
    %c0_5 = arith.constant 0 : index
    %c0_6 = arith.constant 0 : index
    %4 = vector.load %arg4[%c0_4, %c0_5, %c0_6] : memref<1x1x32xf32, #tpu.memory_space<vmem>>, vector<1x1x32xf32>
    %5 = vector.shape_cast %4 : vector<1x1x32xf32> to vector<1x32xf32>
    %6 = vector.broadcast %5 : vector<1x32xf32> to vector<256x32xf32>
    %7 = arith.addf %3, %6 : vector<256x32xf32>
    %c0_7 = arith.constant 0 : index
    %c0_8 = arith.constant 0 : index
    %8 = vector.load %arg5[%c0_7, %c0_8] : memref<256x32xf32, #tpu.memory_space<vmem>>, vector<256x32xf32>
    tpu.vector_store %arg5[%c0_7, %c0_8], %7 {strides = array<i32>} : memref<256x32xf32, #tpu.memory_space<vmem>>, vector<256x32xf32>,
    return
  }
  func.func @transform_0(%arg0: i32, %arg1: memref<2xi32, #tpu.memory_space<smem>>) -> (i32, i32) {
    %c0_i32 = arith.constant 0 : i32
    %c0_i32_0 = arith.constant 0 : i32
    return %arg0, %c0_i32 : i32, i32
  }
  func.func @transform_1(%arg0: i32, %arg1: memref<2xi32, #tpu.memory_space<smem>>) -> (i32, i32, i32) {
    %0 = arith.index_cast %arg0 : i32 to index
    %1 = memref.load %arg1[%0] : memref<2xi32, #tpu.memory_space<smem>>
    %c0_i32 = arith.constant 0 : i32
    %c0_i32_0 = arith.constant 0 : i32
    %c0_i32_1 = arith.constant 0 : i32
    return %1, %c0_i32, %c0_i32_0 : i32, i32, i32
  }
  func.func @transform_2(%arg0: i32, %arg1: memref<2xi32, #tpu.memory_space<smem>>) -> (i32, i32, i32) {
    %0 = arith.index_cast %arg0 : i32 to index
    %1 = memref.load %arg1[%0] : memref<2xi32, #tpu.memory_space<smem>>
    %c0_i32 = arith.constant 0 : i32
    %c0_i32_0 = arith.constant 0 : i32
    %c0_i32_1 = arith.constant 0 : i32
    return %1, %c0_i32, %c0_i32_0 : i32, i32, i32
  }
  func.func @transform_3(%arg0: i32, %arg1: memref<2xi32, #tpu.memory_space<smem>>) -> (i32, i32) {
    %c0_i32 = arith.constant 0 : i32
    %c0_i32_0 = arith.constant 0 : i32
    return %arg0, %c0_i32 : i32, i32
  }
}

</mosaic_0001>

<llo_original>
// kernel: tpu_custom_call.1
$region0: #{tpu_custom_call.1}
  #allocation0 [shape = 'u32[]', space=smem, size = 0x4, offset = 0x4, fixed_abs, tag = 'smem constant byte address 0x4 - core index']
  #allocation1 [shape = 'u32[144,128]{1,0:T(1,128)}', space=vmem, size = 0x12000, scoped, tag = 'internal scratch']
  #allocation2 [shape = 's32[1]{0}', space=sflag, size = 0x4, scoped, tag = 'scoped memory for tpu_custom_call.1']
  #allocation3 [shape = 'u8[512]{0}', space=smem, size = 0x200, scoped, tag = 'prefetched SMEM operand 0']
  %s0 = inlined_call_operand.vmem [shape: s32[2], index: 0, kind: input, shape index: {}]
  %s1 = inlined_call_operand.vmem [shape: f32[512,16], index: 1, kind: input, shape index: {}]
  %s2 = inlined_call_operand.vmem [shape: f32[2,16,32], index: 2, kind: input, shape index: {}]
  %s3 = inlined_call_operand.vmem [shape: f32[2,1,32], index: 3, kind: input, shape index: {}]
  %s4 = inlined_call_operand.vmem [shape: f32[512,32], index: 4, kind: output, shape index: {}]
  %s5 = sld [smem:[#allocation0]]
  $region45: #{tpu_custom_call.1} parent=0
    _
  %s7 = ssub.s32 1, %s5
  %s8 = scalar_select 0, %s7, %s5
  %s9 = sshll.u32 %s0, 4
  %s10 = int_to_ptr.vmem [resolvable:$true] %s9
  %12 = dma.vmem_to_smem %s10, 16, [#allocation3], [#allocation2]
  %13 = dma.done [#allocation2], 16
  %14 = sfence
  loop: start=0, step=1, limit=4
  $region2: #{tpu_custom_call.1} parent=0 // loop_pre_header
    _
  $region3: #{tpu_custom_call.1} parent=0 // loop_header
    %s16 = sphi 0, %s20
    %p17 = scmp.ge.s32.totalorder %s16, 4
    %s26 = sphi 0, %s28
    %s29 = sphi 0, %s26
    %s30 = sphi 0, %s29
    %s46 = sphi 0, %s30
    %s54 = sphi 0, %s56
    %s57 = sphi 0, %s54
    %s58 = sphi 0, %s57
    %s74 = sphi 0, %s58
    %s82 = sphi 0, %s84
    %s85 = sphi 0, %s82
    %s86 = sphi 0, %s85
    %s102 = sphi 0, %s86
    %s108 = sphi 0, %s110
    %s111 = sphi 0, %s108
    %s112 = sphi 0, %s111
    %s128 = sphi 0, %s112
  $region4: #{tpu_custom_call.1} parent=0 // loop_header_branch
    %19 = sbr.rel (%p17) target = $region8
  $region5: #{tpu_custom_call.1} parent=0 // loop_body
    %s21 = ssub.s32 %s16, 1
    %s22 = ssub.s32 %s16, 2
    %s23 = sadd.s32 %s16, 1
    %s24 = ssub.s32 %s16, %s23
    %p25 = scmp.eq.s32.totalorder %s24, 0
    %s27 = sadd.s32 %s26, 1
    %s28 = scalar_select %p25, %s26, %s27
    %p31 = pneg %p25
    %p32 = scmp.eq.s32.totalorder %s16, 1
    %p33 = por %p31, %p32
    %p34 = scmp.ne.s32.totalorder %s26, %s29
    %p35 = scmp.eq.s32.totalorder %s16, 0
    %p36 = por %p34, %p35
    %p37 = scmp.ne.s32.totalorder %s26, %s29
    %p38 = scmp.eq.s32.totalorder %s21, 1
    %p39 = por %p37, %p38
    %p40 = scmp.ne.s32.totalorder %s29, %s30
    %p41 = scmp.eq.s32.totalorder %s21, 0
    %p42 = por %p40, %p41
    %p43 = scmp.ne.s32.totalorder %s29, %s30
    %p44 = scmp.eq.s32.totalorder %s22, 1
    %p45 = por %p43, %p44
    %p47 = scmp.ne.s32.totalorder %s30, %s46
    %p48 = scmp.eq.s32.totalorder %s22, 0
    %p49 = por %p47, %p48
    %s50 = sld [smem:[#allocation3 + %s16]]
    %s51 = sld [smem:[#allocation3 + %s23]]
    %s52 = ssub.s32 %s50, %s51
    %p53 = scmp.eq.s32.totalorder %s52, 0
    %s55 = sadd.s32 %s54, 1
    %s56 = scalar_select %p53, %s54, %s55
    %p59 = pneg %p53
    %p60 = scmp.eq.s32.totalorder %s16, 1
    %p61 = por %p59, %p60
    %p62 = scmp.ne.s32.totalorder %s54, %s57
    %p63 = scmp.eq.s32.totalorder %s16, 0
    %p64 = por %p62, %p63
    %p65 = scmp.ne.s32.totalorder %s54, %s57
    %p66 = scmp.eq.s32.totalorder %s21, 1
    %p67 = por %p65, %p66
    %p68 = scmp.ne.s32.totalorder %s57, %s58
    %p69 = scmp.eq.s32.totalorder %s21, 0
    %p70 = por %p68, %p69
    %p71 = scmp.ne.s32.totalorder %s57, %s58
    %p72 = scmp.eq.s32.totalorder %s22, 1
    %p73 = por %p71, %p72
    %p75 = scmp.ne.s32.totalorder %s58, %s74
    %p76 = scmp.eq.s32.totalorder %s22, 0
    %p77 = por %p75, %p76
    %s78 = sld [smem:[#allocation3 + %s16]]
    %s79 = sld [smem:[#allocation3 + %s23]]
    %s80 = ssub.s32 %s78, %s79
    %p81 = scmp.eq.s32.totalorder %s80, 0
    %s83 = sadd.s32 %s82, 1
    %s84 = scalar_select %p81, %s82, %s83
    %p87 = pneg %p81
    %p88 = scmp.eq.s32.totalorder %s16, 1
    %p89 = por %p87, %p88
    %p90 = scmp.ne.s32.totalorder %s82, %s85
    %p91 = scmp.eq.s32.totalorder %s16, 0
    %p92 = por %p90, %p91
    %p93 = scmp.ne.s32.totalorder %s82, %s85
    %p94 = scmp.eq.s32.totalorder %s21, 1
    %p95 = por %p93, %p94
    %p96 = scmp.ne.s32.totalorder %s85, %s86
    %p97 = scmp.eq.s32.totalorder %s21, 0
    %p98 = por %p96, %p97
    %p99 = scmp.ne.s32.totalorder %s85, %s86
    %p100 = scmp.eq.s32.totalorder %s22, 1
    %p101 = por %p99, %p100
    %p103 = scmp.ne.s32.totalorder %s86, %s102
    %p104 = scmp.eq.s32.totalorder %s22, 0
    %p105 = por %p103, %p104
    %s106 = ssub.s32 %s16, %s23
    %p107 = scmp.eq.s32.totalorder %s106, 0
    %s109 = sadd.s32 %s108, 1
    %s110 = scalar_select %p107, %s108, %s109
    %p113 = pneg %p107
    %p114 = scmp.eq.s32.totalorder %s16, 1
    %p115 = por %p113, %p114
    %p116 = scmp.ne.s32.totalorder %s108, %s111
    %p117 = scmp.eq.s32.totalorder %s16, 0
    %p118 = por %p116, %p117
    %p119 = scmp.ne.s32.totalorder %s108, %s111
    %p120 = scmp.eq.s32.totalorder %s21, 1
    %p121 = por %p119, %p120
    %p122 = scmp.ne.s32.totalorder %s111, %s112
    %p123 = scmp.eq.s32.totalorder %s21, 0
    %p124 = por %p122, %p123
    %p125 = scmp.ne.s32.totalorder %s111, %s112
    %p126 = scmp.eq.s32.totalorder %s22, 1
    %p127 = por %p125, %p126
    %p129 = scmp.ne.s32.totalorder %s112, %s128
    %p130 = scmp.eq.s32.totalorder %s22, 0
    %p131 = por %p129, %p130
    %p132 = scmp.le.s32.totalorder 1, %s16
    %p133 = scmp.lt.s32.totalorder %s16, 3
    %p134 = pnand %p132, %p133
    %p135 = pneg %p134
    // Predicated region
    $region9: #{tpu_custom_call.1} parent=5 // pred_check
      _
    $region10: #{tpu_custom_call.1} parent=5 // pred_check_branch
      %137 = sbr.rel (%p134) target = $region12
    $region11: #{tpu_custom_call.1} parent=5 // pred_region
      %s138 = ssub.s32 %s16, 1
    $region12: #{tpu_custom_call.1} parent=5 // pred_fallthru
      _
    %p139 = scmp.lt.s32.totalorder %s16, 2
    // Predicated region
    $region13: #{tpu_custom_call.1} parent=5 // pred_check
      %p140 = pneg %p139
    $region14: #{tpu_custom_call.1} parent=5 // pred_check_branch
      %142 = sbr.rel (%p140) target = $region16
    $region15: #{tpu_custom_call.1} parent=5 // pred_region
      // Predicated region
      $region17: #{tpu_custom_call.1} parent=15 // pred_check
        %p143 = pneg %p36
      $region18: #{tpu_custom_call.1} parent=15 // pred_check_branch
        %145 = sbr.rel (%p143) target = $region20
      $region19: #{tpu_custom_call.1} parent=15 // pred_region
        %s146 = smul.u32 32, %s16
        %p147 = scmp.lt.s32.totalorder %s146, 63
        %s148 = scalar_select %p147, %s146, 63
        %s149 = smul.addr %s148, 8
        %s150 = scalar_lea.vmem %s1, %s149
        %s151 = smul.u32 32, %s16
      $region20: #{tpu_custom_call.1} parent=15 // pred_fallthru
        _
      // Predicated region
      $region21: #{tpu_custom_call.1} parent=15 // pred_check
        %p152 = pneg %p64
      $region22: #{tpu_custom_call.1} parent=15 // pred_check_branch
        %154 = sbr.rel (%p152) target = $region24
      $region23: #{tpu_custom_call.1} parent=15 // pred_region
        %s155 = sld [smem:[#allocation3 + %s16]]
        %p156 = scmp.lt.s32.totalorder %s155, 1
        %s157 = scalar_select %p156, %s155, 1
        %s158 = smul.addr %s157, 2
        %s159 = smul.addr %s158, 8
        %s160 = scalar_lea.vmem %s2, %s159
        %s161 = sld [smem:[#allocation3 + %s16]]
      $region24: #{tpu_custom_call.1} parent=15 // pred_fallthru
        _
      // Predicated region
      $region25: #{tpu_custom_call.1} parent=15 // pred_check
        %p162 = pneg %p92
      $region26: #{tpu_custom_call.1} parent=15 // pred_check_branch
        %164 = sbr.rel (%p162) target = $region28
      $region27: #{tpu_custom_call.1} parent=15 // pred_region
        %s165 = sld [smem:[#allocation3 + %s16]]
        %p166 = scmp.lt.s32.totalorder %s165, 1
        %s167 = scalar_select %p166, %s165, 1
        %s168 = scalar_lea.vmem %s3, %s167
        %s169 = sld [smem:[#allocation3 + %s16]]
      $region28: #{tpu_custom_call.1} parent=15 // pred_fallthru
        _
    $region16: #{tpu_custom_call.1} parent=5 // pred_fallthru
      _
    %p170 = scmp.le.s32.totalorder 1, %s16
    %p171 = scmp.lt.s32.totalorder %s16, 3
    %p172 = pnand %p170, %p171
    %p173 = pneg %p172
    // Predicated region
    $region29: #{tpu_custom_call.1} parent=5 // pred_check
      _
    $region30: #{tpu_custom_call.1} parent=5 // pred_check_branch
      %175 = sbr.rel (%p172) target = $region32
    $region31: #{tpu_custom_call.1} parent=5 // pred_region
      %s176 = ssub.s32 %s16, 1
      %s177 = smul.u32 32, %s21
      %p178 = scmp.lt.s32.totalorder %s177, 63
      %s179 = scalar_select %p178, %s177, 63
      %s180 = smul.addr %s179, 8
      %s181 = scalar_lea.vmem %s1, %s180
      %p182 = pneg %p42
      %p183 = pneg %p39
      %s184 = sld [smem:[#allocation3 + %s21]]
      %p185 = scmp.lt.s32.totalorder %s184, 1
      %s186 = scalar_select %p185, %s184, 1
      %s187 = smul.addr %s186, 2
      %s188 = smul.addr %s187, 8
      %s189 = scalar_lea.vmem %s2, %s188
      %p190 = pneg %p70
      %p191 = pneg %p67
      %s192 = sld [smem:[#allocation3 + %s21]]
      %p193 = scmp.lt.s32.totalorder %s192, 1
      %s194 = scalar_select %p193, %s192, 1
      %s195 = scalar_lea.vmem %s3, %s194
      %p196 = pneg %p98
      %p197 = pneg %p95
      %p198 = pneg %p124
      %p199 = pneg %p121
      %s200 = smul.u32 32, %s21
      %p201 = scmp.lt.s32.totalorder %s200, 63
      %s202 = scalar_select %p201, %s200, 63
      %s203 = smul.addr %s202, 8
      %s204 = scalar_lea.vmem %s4, %s203
      %s205 = smul.u32 32, %s21
      %p206 = scmp.lt.s32.totalorder %s205, 63
      %s207 = scalar_select %p206, %s205, 63
      %s208 = smul.addr %s207, 8
      %s209 = scalar_lea.vmem %s1, %s208
      %s210 = smul.u32 32, %s21
      %s211 = sld [smem:[#allocation3 + %s21]]
      %p212 = scmp.lt.s32.totalorder %s211, 1
      %s213 = scalar_select %p212, %s211, 1
      %s214 = smul.addr %s213, 2
      %s215 = smul.addr %s214, 8
      %s216 = scalar_lea.vmem %s2, %s215
      %s217 = sld [smem:[#allocation3 + %s21]]
      %s218 = sld [smem:[#allocation3 + %s21]]
      %p219 = scmp.lt.s32.totalorder %s218, 1
      %s220 = scalar_select %p219, %s218, 1
      %s221 = scalar_lea.vmem %s3, %s220
      %s222 = sld [smem:[#allocation3 + %s21]]
      %s223 = smul.u32 32, %s21
      %p224 = scmp.lt.s32.totalorder %s223, 63
      %s225 = scalar_select %p224, %s223, 63
      %s226 = smul.addr %s225, 8
      %s227 = scalar_lea.vmem %s4, %s226
      %s228 = smul.u32 32, %s21
      %v229 = vld [vmem:[%s209] sm:$0xff]
      %v230 = vld [vmem:[%s209 + $0x8] sm:$0xff]
      %v231 = vld [vmem:[%s209 + $0x10] sm:$0xff]
      %v232 = vld [vmem:[%s209 + $0x18] sm:$0xff]
      %v233 = vld [vmem:[%s209 + $0x20] sm:$0xff]
      %v234 = vld [vmem:[%s209 + $0x28] sm:$0xff]
      %v235 = vld [vmem:[%s209 + $0x30] sm:$0xff]
      %v236 = vld [vmem:[%s209 + $0x38] sm:$0xff]
      %v237 = vld [vmem:[%s209 + $0x40] sm:$0xff]
      %v238 = vld [vmem:[%s209 + $0x48] sm:$0xff]
      %v239 = vld [vmem:[%s209 + $0x50] sm:$0xff]
      %v240 = vld [vmem:[%s209 + $0x58] sm:$0xff]
      %v241 = vld [vmem:[%s209 + $0x60] sm:$0xff]
      %v242 = vld [vmem:[%s209 + $0x68] sm:$0xff]
      %v243 = vld [vmem:[%s209 + $0x70] sm:$0xff]
      %v244 = vld [vmem:[%s209 + $0x78] sm:$0xff]
      %v245 = vld [vmem:[%s209 + $0x80] sm:$0xff]
      %v246 = vld [vmem:[%s209 + $0x88] sm:$0xff]
      %v247 = vld [vmem:[%s209 + $0x90] sm:$0xff]
      %v248 = vld [vmem:[%s209 + $0x98] sm:$0xff]
      %v249 = vld [vmem:[%s209 + $0xa0] sm:$0xff]
      %v250 = vld [vmem:[%s209 + $0xa8] sm:$0xff]
      %v251 = vld [vmem:[%s209 + $0xb0] sm:$0xff]
      %v252 = vld [vmem:[%s209 + $0xb8] sm:$0xff]
      %v253 = vld [vmem:[%s209 + $0xc0] sm:$0xff]
      %v254 = vld [vmem:[%s209 + $0xc8] sm:$0xff]
      %v255 = vld [vmem:[%s209 + $0xd0] sm:$0xff]
      %v256 = vld [vmem:[%s209 + $0xd8] sm:$0xff]
      %v257 = vld [vmem:[%s209 + $0xe0] sm:$0xff]
      %v258 = vld [vmem:[%s209 + $0xe8] sm:$0xff]
      %v259 = vld [vmem:[%s209 + $0xf0] sm:$0xff]
      %v260 = vld [vmem:[%s209 + $0xf8] sm:$0xff]
      %v261 = vld [vmem:[%s216] sm:$0xff]
      %v262 = vld [vmem:[%s216 + $0x8] sm:$0xff]
      %v263 = vld [vmem:[%s221] sm:$0x1]
      %v265 = vlaneseq
      %v266 = vshrl.u32 %v265, 7
      %v267 = vsub.s32 0, %v266
      %v268 = vrot.slane %v263, %v267
      %vm270 = vcmask 130048
      %v272 = vsel %vm270, %v229, 0
      %v275 = vsel %vm270, %v230, 0
      %v278 = vsel %vm270, %v231, 0
      %v281 = vsel %vm270, %v232, 0
      %v284 = vsel %vm270, %v233, 0
      %v287 = vsel %vm270, %v234, 0
      %v290 = vsel %vm270, %v235, 0
      %v293 = vsel %vm270, %v236, 0
      %v296 = vsel %vm270, %v237, 0
      %v299 = vsel %vm270, %v238, 0
      %v302 = vsel %vm270, %v239, 0
      %v305 = vsel %vm270, %v240, 0
      %v308 = vsel %vm270, %v241, 0
      %v311 = vsel %vm270, %v242, 0
      %v314 = vsel %vm270, %v243, 0
      %v317 = vsel %vm270, %v244, 0
      %v320 = vsel %vm270, %v245, 0
      %v323 = vsel %vm270, %v246, 0
      %v326 = vsel %vm270, %v247, 0
      %v329 = vsel %vm270, %v248, 0
      %v332 = vsel %vm270, %v249, 0
      %v335 = vsel %vm270, %v250, 0
      %v338 = vsel %vm270, %v251, 0
      %v341 = vsel %vm270, %v252, 0
      %v344 = vsel %vm270, %v253, 0
      %v347 = vsel %vm270, %v254, 0
      %v350 = vsel %vm270, %v255, 0
      %v353 = vsel %vm270, %v256, 0
      %v356 = vsel %vm270, %v257, 0
      %v359 = vsel %vm270, %v258, 0
      %v362 = vsel %vm270, %v259, 0
      %v365 = vsel %vm270, %v260, 0
      %367 = vmatprep.subr.mxu0 0.0
      %368 = vmatpush1.msra.mxu0 %v261
      %369 = vmatprep.subr.mxu0 0.0
      %370 = vmatpush1.msra.mxu0 %v262
      %371 = vmatprep.subr.mxu0 0.0
      %372 = vmatpush1.msra.mxu0 0.0
      %373 = vmatprep.subr.mxu0 0.0
      %374 = vmatpush1.msra.mxu0 0.0
      %375 = vmatprep.subr.mxu0 0.0
      %376 = vmatpush1.msra.mxu0 0.0
      %377 = vmatprep.subr.mxu0 0.0
      %378 = vmatpush1.msra.mxu0 0.0
      %379 = vmatprep.subr.mxu0 0.0
      %380 = vmatpush1.msra.mxu0 0.0
      %381 = vmatprep.subr.mxu0 0.0
      %382 = vmatpush1.msra.mxu0 0.0
      %383 = vmatprep.subr.mxu0 0.0
      %384 = vmatpush1.msra.mxu0 0.0
      %385 = vmatprep.subr.mxu0 0.0
      %386 = vmatpush1.msra.mxu0 0.0
      %387 = vmatprep.subr.mxu0 0.0
      %388 = vmatpush1.msra.mxu0 0.0
      %389 = vmatprep.subr.mxu0 0.0
      %390 = vmatpush1.msra.mxu0 0.0
      %391 = vmatprep.subr.mxu0 0.0
      %392 = vmatpush1.msra.mxu0 0.0
      %393 = vmatprep.subr.mxu0 0.0
      %394 = vmatpush1.msra.mxu0 0.0
      %395 = vmatprep.subr.mxu0 0.0
      %396 = vmatpush1.msra.mxu0 0.0
      %397 = vmatprep.subr.mxu0 0.0
      %398 = vmatpush1.msra.mxu0 0.0
      %399 = vmatprep.subr.mxu0 0.0
      %400 = vmatpush1.msra.mxu0 0.0
      %401 = vmatprep.subr.mxu0 0.0
      %402 = vmatpush1.msra.mxu0 0.0
      %403 = vmatprep.subr.mxu0 0.0
      %404 = vmatpush1.msra.mxu0 0.0
      %405 = vmatprep.subr.mxu0 0.0
      %406 = vmatpush1.msra.mxu0 0.0
      %407 = vmatprep.subr.mxu0 0.0
      %408 = vmatpush1.msra.mxu0 0.0
      %409 = vmatprep.subr.mxu0 0.0
      %410 = vmatpush1.msra.mxu0 0.0
      %411 = vmatprep.subr.mxu0 0.0
      %412 = vmatpush1.msra.mxu0 0.0
      %413 = vmatprep.subr.mxu0 0.0
      %414 = vmatpush1.msra.mxu0 0.0
      %415 = vmatprep.subr.mxu0 0.0
      %416 = vmatpush1.msra.mxu0 0.0
      %417 = vmatprep.subr.mxu0 0.0
      %418 = vmatpush1.msra.mxu0 0.0
      %419 = vmatprep.subr.mxu0 0.0
      %420 = vmatpush1.msra.mxu0 0.0
      %421 = vmatprep.subr.mxu0 0.0
      %422 = vmatpush1.msra.mxu0 0.0
      %423 = vmatprep.subr.mxu0 0.0
      %424 = vmatpush1.msra.mxu0 0.0
      %425 = vmatprep.subr.mxu0 0.0
      %426 = vmatpush1.msra.mxu0 0.0
      %427 = vmatprep.subr.mxu0 0.0
      %428 = vmatpush1.msra.mxu0 0.0
      %429 = vmatprep.subr.mxu0 0.0
      %430 = vmatpush1.msra.mxu0 0.0
      %431 = vmatprep.mubr.f32.mxu0 0.0
      %432 = vmatmul.mubr.f32.gmra.mrb[0].mxu0 %v272
      %v433 = vpop.f32.mrb[0].mxu0
      %v434 = vadd.f32 %v268, %v433
      %v435 = vpop.f32.mrb[0].mxu0
      %436 = vmatprep.mubr.f32.mxu0 0.0
      %437 = vmatmul.mubr.f32.gmra.mrb[0].mxu0 %v275
      %v438 = vpop.f32.mrb[0].mxu0
      %v439 = vadd.f32 %v268, %v438
      %v440 = vpop.f32.mrb[0].mxu0
      %441 = vmatprep.mubr.f32.mxu0 0.0
      %442 = vmatmul.mubr.f32.gmra.mrb[0].mxu0 %v278
      %v443 = vpop.f32.mrb[0].mxu0
      %v444 = vadd.f32 %v268, %v443
      %v445 = vpop.f32.mrb[0].mxu0
      %446 = vmatprep.mubr.f32.mxu0 0.0
      %447 = vmatmul.mubr.f32.gmra.mrb[0].mxu0 %v281
      %v448 = vpop.f32.mrb[0].mxu0
      %v449 = vadd.f32 %v268, %v448
      %v450 = vpop.f32.mrb[0].mxu0
      %451 = vmatprep.mubr.f32.mxu0 0.0
      %452 = vmatmul.mubr.f32.gmra.mrb[0].mxu0 %v284
      %v453 = vpop.f32.mrb[0].mxu0
      %v454 = vadd.f32 %v268, %v453
      %v455 = vpop.f32.mrb[0].mxu0
      %456 = vmatprep.mubr.f32.mxu0 0.0
      %457 = vmatmul.mubr.f32.gmra.mrb[0].mxu0 %v287
      %v458 = vpop.f32.mrb[0].mxu0
      %v459 = vadd.f32 %v268, %v458
      %v460 = vpop.f32.mrb[0].mxu0
      %461 = vmatprep.mubr.f32.mxu0 0.0
      %462 = vmatmul.mubr.f32.gmra.mrb[0].mxu0 %v290
      %v463 = vpop.f32.mrb[0].mxu0
      %v464 = vadd.f32 %v268, %v463
      %v465 = vpop.f32.mrb[0].mxu0
      %466 = vmatprep.mubr.f32.mxu0 0.0
      %467 = vmatmul.mubr.f32.gmra.mrb[0].mxu0 %v293
      %v468 = vpop.f32.mrb[0].mxu0
      %v469 = vadd.f32 %v268, %v468
      %v470 = vpop.f32.mrb[0].mxu0
      %471 = vmatprep.mubr.f32.mxu0 0.0
      %472 = vmatmul.mubr.f32.gmra.mrb[0].mxu0 %v296
      %v473 = vpop.f32.mrb[0].mxu0
      %v474 = vadd.f32 %v268, %v473
      %v475 = vpop.f32.mrb[0].mxu0
      %476 = vmatprep.mubr.f32.mxu0 0.0
      %477 = vmatmul.mubr.f32.gmra.mrb[0].mxu0 %v299
      %v478 = vpop.f32.mrb[0].mxu0
      %v479 = vadd.f32 %v268, %v478
      %v480 = vpop.f32.mrb[0].mxu0
      %481 = vmatprep.mubr.f32.mxu0 0.0
      %482 = vmatmul.mubr.f32.gmra.mrb[0].mxu0 %v302
      %v483 = vpop.f32.mrb[0].mxu0
      %v484 = vadd.f32 %v268, %v483
      %v485 = vpop.f32.mrb[0].mxu0
      %486 = vmatprep.mubr.f32.mxu0 0.0
      %487 = vmatmul.mubr.f32.gmra.mrb[0].mxu0 %v305
      %v488 = vpop.f32.mrb[0].mxu0
      %v489 = vadd.f32 %v268, %v488
      %v490 = vpop.f32.mrb[0].mxu0
      %491 = vmatprep.mubr.f32.mxu0 0.0
      %492 = vmatmul.mubr.f32.gmra.mrb[0].mxu0 %v308
      %v493 = vpop.f32.mrb[0].mxu0
      %v494 = vadd.f32 %v268, %v493
      %v495 = vpop.f32.mrb[0].mxu0
      %496 = vmatprep.mubr.f32.mxu0 0.0
      %497 = vmatmul.mubr.f32.gmra.mrb[0].mxu0 %v311
      %v498 = vpop.f32.mrb[0].mxu0
      %v499 = vadd.f32 %v268, %v498
      %v500 = vpop.f32.mrb[0].mxu0
      %501 = vmatprep.mubr.f32.mxu0 0.0
      %502 = vmatmul.mubr.f32.gmra.mrb[0].mxu0 %v314
      %v503 = vpop.f32.mrb[0].mxu0
      %v504 = vadd.f32 %v268, %v503
      %v505 = vpop.f32.mrb[0].mxu0
      %506 = vmatprep.mubr.f32.mxu0 0.0
      %507 = vmatmul.mubr.f32.gmra.mrb[0].mxu0 %v317
      %v508 = vpop.f32.mrb[0].mxu0
      %v509 = vadd.f32 %v268, %v508
      %v510 = vpop.f32.mrb[0].mxu0
      %511 = vmatprep.mubr.f32.mxu0 0.0
      %512 = vmatmul.mubr.f32.gmra.mrb[0].mxu0 %v320
      %v513 = vpop.f32.mrb[0].mxu0
      %v514 = vadd.f32 %v268, %v513
      %v515 = vpop.f32.mrb[0].mxu0
      %516 = vmatprep.mubr.f32.mxu0 0.0
      %517 = vmatmul.mubr.f32.gmra.mrb[0].mxu0 %v323
      %v518 = vpop.f32.mrb[0].mxu0
      %v519 = vadd.f32 %v268, %v518
      %v520 = vpop.f32.mrb[0].mxu0
      %521 = vmatprep.mubr.f32.mxu0 0.0
      %522 = vmatmul.mubr.f32.gmra.mrb[0].mxu0 %v326
      %v523 = vpop.f32.mrb[0].mxu0
      %v524 = vadd.f32 %v268, %v523
      %v525 = vpop.f32.mrb[0].mxu0
      %526 = vmatprep.mubr.f32.mxu0 0.0
      %527 = vmatmul.mubr.f32.gmra.mrb[0].mxu0 %v329
      %v528 = vpop.f32.mrb[0].mxu0
      %v529 = vadd.f32 %v268, %v528
      %v530 = vpop.f32.mrb[0].mxu0
      %531 = vmatprep.mubr.f32.mxu0 0.0
      %532 = vmatmul.mubr.f32.gmra.mrb[0].mxu0 %v332
      %v533 = vpop.f32.mrb[0].mxu0
      %v534 = vadd.f32 %v268, %v533
      %v535 = vpop.f32.mrb[0].mxu0
      %536 = vmatprep.mubr.f32.mxu0 0.0
      %537 = vmatmul.mubr.f32.gmra.mrb[0].mxu0 %v335
      %v538 = vpop.f32.mrb[0].mxu0
      %v539 = vadd.f32 %v268, %v538
      %v540 = vpop.f32.mrb[0].mxu0
      %541 = vmatprep.mubr.f32.mxu0 0.0
      %542 = vmatmul.mubr.f32.gmra.mrb[0].mxu0 %v338
      %v543 = vpop.f32.mrb[0].mxu0
      %v544 = vadd.f32 %v268, %v543
      %v545 = vpop.f32.mrb[0].mxu0
      %546 = vmatprep.mubr.f32.mxu0 0.0
      %547 = vmatmul.mubr.f32.gmra.mrb[0].mxu0 %v341
      %v548 = vpop.f32.mrb[0].mxu0
      %v549 = vadd.f32 %v268, %v548
      %v550 = vpop.f32.mrb[0].mxu0
      %551 = vmatprep.mubr.f32.mxu0 0.0
      %552 = vmatmul.mubr.f32.gmra.mrb[0].mxu0 %v344
      %v553 = vpop.f32.mrb[0].mxu0
      %v554 = vadd.f32 %v268, %v553
      %v555 = vpop.f32.mrb[0].mxu0
      %556 = vmatprep.mubr.f32.mxu0 0.0
      %557 = vmatmul.mubr.f32.gmra.mrb[0].mxu0 %v347
      %v558 = vpop.f32.mrb[0].mxu0
      %v559 = vadd.f32 %v268, %v558
      %v560 = vpop.f32.mrb[0].mxu0
      %561 = vmatprep.mubr.f32.mxu0 0.0
      %562 = vmatmul.mubr.f32.gmra.mrb[0].mxu0 %v350
      %v563 = vpop.f32.mrb[0].mxu0
      %v564 = vadd.f32 %v268, %v563
      %v565 = vpop.f32.mrb[0].mxu0
      %566 = vmatprep.mubr.f32.mxu0 0.0
      %567 = vmatmul.mubr.f32.gmra.mrb[0].mxu0 %v353
      %v568 = vpop.f32.mrb[0].mxu0
      %v569 = vadd.f32 %v268, %v568
      %v570 = vpop.f32.mrb[0].mxu0
      %571 = vmatprep.mubr.f32.mxu0 0.0
      %572 = vmatmul.mubr.f32.gmra.mrb[0].mxu0 %v356
      %v573 = vpop.f32.mrb[0].mxu0
      %v574 = vadd.f32 %v268, %v573
      %v575 = vpop.f32.mrb[0].mxu0
      %576 = vmatprep.mubr.f32.mxu0 0.0
      %577 = vmatmul.mubr.f32.gmra.mrb[0].mxu0 %v359
      %v578 = vpop.f32.mrb[0].mxu0
      %v579 = vadd.f32 %v268, %v578
      %v580 = vpop.f32.mrb[0].mxu0
      %581 = vmatprep.mubr.f32.mxu0 0.0
      %582 = vmatmul.mubr.f32.gmra.mrb[0].mxu0 %v362
      %v583 = vpop.f32.mrb[0].mxu0
      %v584 = vadd.f32 %v268, %v583
      %v585 = vpop.f32.mrb[0].mxu0
      %586 = vmatprep.mubr.f32.mxu0 0.0
      %587 = vmatmul.mubr.f32.gmra.mrb[0].mxu0 %v365
      %v588 = vpop.f32.mrb[0].mxu0
      %v589 = vadd.f32 %v268, %v588
      %v590 = vpop.f32.mrb[0].mxu0
      %591 = vdwg.mxu0
      %vm592 = vcmask 261120
      %593 = vst.msk [vmem:[%s227] sm:$0xff] %vm592, %v434
      %594 = vst.msk [vmem:[%s227 + $0x8] sm:$0xff] %vm592, %v439
      %595 = vst.msk [vmem:[%s227 + $0x10] sm:$0xff] %vm592, %v444
      %596 = vst.msk [vmem:[%s227 + $0x18] sm:$0xff] %vm592, %v449
      %597 = vst.msk [vmem:[%s227 + $0x20] sm:$0xff] %vm592, %v454
      %598 = vst.msk [vmem:[%s227 + $0x28] sm:$0xff] %vm592, %v459
      %599 = vst.msk [vmem:[%s227 + $0x30] sm:$0xff] %vm592, %v464
      %600 = vst.msk [vmem:[%s227 + $0x38] sm:$0xff] %vm592, %v469
      %601 = vst.msk [vmem:[%s227 + $0x40] sm:$0xff] %vm592, %v474
      %602 = vst.msk [vmem:[%s227 + $0x48] sm:$0xff] %vm592, %v479
      %603 = vst.msk [vmem:[%s227 + $0x50] sm:$0xff] %vm592, %v484
      %604 = vst.msk [vmem:[%s227 + $0x58] sm:$0xff] %vm592, %v489
      %605 = vst.msk [vmem:[%s227 + $0x60] sm:$0xff] %vm592, %v494
      %606 = vst.msk [vmem:[%s227 + $0x68] sm:$0xff] %vm592, %v499
      %607 = vst.msk [vmem:[%s227 + $0x70] sm:$0xff] %vm592, %v504
      %608 = vst.msk [vmem:[%s227 + $0x78] sm:$0xff] %vm592, %v509
      %609 = vst.msk [vmem:[%s227 + $0x80] sm:$0xff] %vm592, %v514
      %610 = vst.msk [vmem:[%s227 + $0x88] sm:$0xff] %vm592, %v519
      %611 = vst.msk [vmem:[%s227 + $0x90] sm:$0xff] %vm592, %v524
      %612 = vst.msk [vmem:[%s227 + $0x98] sm:$0xff] %vm592, %v529
      %613 = vst.msk [vmem:[%s227 + $0xa0] sm:$0xff] %vm592, %v534
      %614 = vst.msk [vmem:[%s227 + $0xa8] sm:$0xff] %vm592, %v539
      %615 = vst.msk [vmem:[%s227 + $0xb0] sm:$0xff] %vm592, %v544
      %616 = vst.msk [vmem:[%s227 + $0xb8] sm:$0xff] %vm592, %v549
      %617 = vst.msk [vmem:[%s227 + $0xc0] sm:$0xff] %vm592, %v554
      %618 = vst.msk [vmem:[%s227 + $0xc8] sm:$0xff] %vm592, %v559
      %619 = vst.msk [vmem:[%s227 + $0xd0] sm:$0xff] %vm592, %v564
      %620 = vst.msk [vmem:[%s227 + $0xd8] sm:$0xff] %vm592, %v569
      %621 = vst.msk [vmem:[%s227 + $0xe0] sm:$0xff] %vm592, %v574
      %622 = vst.msk [vmem:[%s227 + $0xe8] sm:$0xff] %vm592, %v579
      %623 = vst.msk [vmem:[%s227 + $0xf0] sm:$0xff] %vm592, %v584
      %624 = vst.msk [vmem:[%s227 + $0xf8] sm:$0xff] %vm592, %v589
      %s625 = smul.u32 32, %s21
      %p626 = scmp.lt.s32.totalorder %s625, 63
      %s627 = scalar_select %p626, %s625, 63
      %s628 = smul.addr %s627, 8
      %s629 = scalar_lea.vmem %s4, %s628
      // Predicated region
      $region33: #{tpu_custom_call.1} parent=31 // pred_check
        %p630 = pneg %p121
      $region34: #{tpu_custom_call.1} parent=31 // pred_check_branch
        %632 = sbr.rel (%p630) target = $region36
      $region35: #{tpu_custom_call.1} parent=31 // pred_region
        %s633 = smul.u32 32, %s21
      $region36: #{tpu_custom_call.1} parent=31 // pred_fallthru
        _
    $region32: #{tpu_custom_call.1} parent=5 // pred_fallthru
      _
    %p634 = scmp.le.s32.totalorder 2, %s16
    // Predicated region
    $region37: #{tpu_custom_call.1} parent=5 // pred_check
      %p635 = pneg %p634
    $region38: #{tpu_custom_call.1} parent=5 // pred_check_branch
      %637 = sbr.rel (%p635) target = $region40
    $region39: #{tpu_custom_call.1} parent=5 // pred_region
      %s638 = ssub.s32 %s16, 2
      // Predicated region
      $region41: #{tpu_custom_call.1} parent=39 // pred_check
        %p639 = pneg %p127
      $region42: #{tpu_custom_call.1} parent=39 // pred_check_branch
        %641 = sbr.rel (%p639) target = $region44
      $region43: #{tpu_custom_call.1} parent=39 // pred_region
        %s642 = smul.u32 32, %s22
        %p643 = scmp.lt.s32.totalorder %s642, 63
        %s644 = scalar_select %p643, %s642, 63
        %s645 = smul.addr %s644, 8
        %s646 = scalar_lea.vmem %s4, %s645
      $region44: #{tpu_custom_call.1} parent=39 // pred_fallthru
        _
    $region40: #{tpu_custom_call.1} parent=5 // pred_fallthru
      _
  $region6: #{tpu_custom_call.1} parent=0 // loop_footer
    %s20 = sadd.s32 1, %s16
  $region7: #{tpu_custom_call.1} parent=0 // loop_footer_branch
    %15 = sbr.rel target = $region3
  $region8: #{tpu_custom_call.1} parent=0 // loop_exit
    _

</llo_original>
